<compile_context>
chip_gen: v5e
topology: v5e:2x2
jax: 0.10.0
libtpu: 0.0.40
codegen_flags: <defaults>
</compile_context>

<pallas_src>
import jax
import jax.numpy as jnp
from jax.experimental import pallas as pl
from jax.experimental.pallas import tpu as pltpu

F_PAD = 128  # lane-dense feature padding (one full vreg lane width)


def _round_up(n: int, m: int) -> int:
    return ((n + m - 1) // m) * m


def qnet_kernel(x_ref, w_ref, b_ref, out_ref):
    """Fused 3-layer MLP: out = relu(relu(relu(x@W0+b0)@W1+b1)@W2+b2).

    x_ref  : (TB, F_PAD)        activation tile (f32, zero-padded features)
    w_ref  : (3, F_PAD, F_PAD)  packed, pre-transposed, zero-padded weights
    b_ref  : (3, 1, F_PAD)      packed, zero-padded biases (f32)
    out_ref: (TB, F_PAD)        lane-dense padded Q output (f32)
    """
    x = x_ref[...]
    w0, w1, w2 = w_ref[0], w_ref[1], w_ref[2]   # static leading-index slices: free
    mm_dt = w0.dtype                            # f32 (default) or bf16 MXU operands

    h = jnp.dot(x.astype(mm_dt), w0, preferred_element_type=jnp.float32)
    h = jnp.maximum(h + b_ref[0], 0.0)

    h = jnp.dot(h.astype(mm_dt), w1, preferred_element_type=jnp.float32)
    h = jnp.maximum(h + b_ref[1], 0.0)

    q = jnp.dot(h.astype(mm_dt), w2, preferred_element_type=jnp.float32)
    q = jnp.maximum(q + b_ref[2], 0.0)          # Qnet applies ReLU to the Q head too

    out_ref[...] = q.astype(out_ref.dtype)


def qnet_forward(x, params, *, batch_tile=256):
    """x: (B, in_dim) float32. params: dict from init_params (kernel-layout slabs)."""
    assert batch_tile % 8 == 0
    w_slab, b_slab = params["w"], params["b"]
    out_dim = params["out_dim"]
    B, in_dim = x.shape
    F = w_slab.shape[-1]

    # Batch tile: small batches -> one whole-batch tile (rounded to sublane=8);
    # large batches -> pipelined grid of `batch_tile`-row tiles.
    tb = min(batch_tile, _round_up(B, 8))
    b_pad = _round_up(B, tb)

    # Only per-call layout work: zero-pad activations to the lane-dense tile shape.
    x_pad = jnp.pad(x, ((0, b_pad - B), (0, F - in_dim)))

    q_pad = pl.pallas_call(
        qnet_kernel,
        out_shape=jax.ShapeDtypeStruct((b_pad, F), jnp.float32),
        grid_spec=pltpu.PrefetchScalarGridSpec(
            num_scalar_prefetch=0,
            grid=(b_pad // tb,),
            in_specs=[
                pl.BlockSpec((tb, F), lambda i: (i, 0)),        # x tile marches over batch
                pl.BlockSpec((3, F, F), lambda i: (0, 0, 0)),   # weights stay VMEM-resident
                pl.BlockSpec((3, 1, F), lambda i: (0, 0, 0)),   # biases stay VMEM-resident
            ],
            out_specs=pl.BlockSpec((tb, F), lambda i: (i, 0)),
        ),
        compiler_params=pltpu.CompilerParams(
            dimension_semantics=("parallel",),
        ),
    )(x_pad, w_slab, b_slab)

    return q_pad[:B, :out_dim]


def init_params(key, in_dim, out_dim, *, mm_dtype=jnp.float32):
    """PyTorch nn.Linear-style init, stored directly in kernel layout.

    Weights are pre-transposed to (in_features, out_features), zero-padded to
    (F_PAD, F_PAD) and packed into one (3, F_PAD, F_PAD) slab; biases are packed
    into one (3, 1, F_PAD) f32 slab. Zero padding is exact: padded input columns
    stay zero through every layer (0-weight rows/cols, 0 bias, relu(0)=0).
    Set mm_dtype=jnp.bfloat16 on v6e/v7x for MXU-native operands at large batch.
    """
    h_dim = in_dim  # module sets self.h_dim = in_dim
    keys = jax.random.split(key, 6)

    def linear(kw, kb, fan_in, fan_out):
        bound = 1.0 / jnp.sqrt(jnp.float32(fan_in))
        w = jax.random.uniform(kw, (fan_out, fan_in), jnp.float32, -bound, bound)
        b = jax.random.uniform(kb, (fan_out,), jnp.float32, -bound, bound)
        return w, b

    w1, b1 = linear(keys[0], keys[1], in_dim, h_dim)
    w3, b3 = linear(keys[2], keys[3], h_dim, h_dim)
    w2, b2 = linear(keys[4], keys[5], h_dim, out_dim)

    w_slab = jnp.zeros((3, F_PAD, F_PAD), jnp.float32)
    w_slab = w_slab.at[0, :in_dim, :h_dim].set(w1.T)
    w_slab = w_slab.at[1, :h_dim, :h_dim].set(w3.T)
    w_slab = w_slab.at[2, :h_dim, :out_dim].set(w2.T)
    w_slab = w_slab.astype(mm_dtype)

    b_slab = jnp.zeros((3, 1, F_PAD), jnp.float32)
    b_slab = b_slab.at[0, 0, :h_dim].set(b1)
    b_slab = b_slab.at[1, 0, :h_dim].set(b3)
    b_slab = b_slab.at[2, 0, :out_dim].set(b2)

    return {
        "w": w_slab,
        "b": b_slab,
        "in_dim": in_dim,
        "out_dim": out_dim,
        "raw": {"fc1": (w1, b1), "fc3": (w3, b3), "fc2": (w2, b2)},
    }


def qnet_reference(x, params):
    (w1, b1) = params["raw"]["fc1"]
    (w3, b3) = params["raw"]["fc3"]
    (w2, b2) = params["raw"]["fc2"]
    h1 = jnp.maximum(x @ w1.T + b1, 0.0)
    h2 = jnp.maximum(h1 @ w3.T + b3, 0.0)
    return jnp.maximum(h2 @ w2.T + b2, 0.0)


if __name__ == "__main__":
    # CartPole-like setup: obs dim = 4, actions = 2.
    in_dim, out_dim = 4, 2

    key = jax.random.PRNGKey(0)
    k_params, k_small, k_big = jax.random.split(key, 3)
    params = init_params(k_params, in_dim, out_dim)  # kernel layout built ONCE here

    # 1) Tiny batch (single grid step) — matches original per-step usage.
    x_small = jax.random.normal(k_small, (8, in_dim), dtype=jnp.float32)
    q_small = jax.block_until_ready(qnet_forward(x_small, params))
    assert q_small.shape == (8, out_dim)
    assert jnp.allclose(q_small, qnet_reference(x_small, params), atol=1e-4, rtol=1e-4)

    # 2) Larger batch (multi-tile grid, weight-resident BlockSpecs, padded tail rows).
    x_big = jax.random.normal(k_big, (300, in_dim), dtype=jnp.float32)
    q_big = jax.block_until_ready(qnet_forward(x_big, params))
    assert q_big.shape == (300, out_dim)
    assert jnp.allclose(q_big, qnet_reference(x_big, params), atol=1e-4, rtol=1e-4)

    print("KERNEL_OK")
</pallas_src>

<mosaic_0001>
module attributes {stable_mosaic.version = 11 : i64} {
  func.func @qnet_kernel(%arg0: i32, %arg1: memref<8x128xf32, #tpu.memory_space<vmem>>, %arg2: memref<3x128x128xf32, #tpu.memory_space<vmem>>, %arg3: memref<3x1x128xf32, #tpu.memory_space<vmem>>, %arg4: memref<8x128xf32, #tpu.memory_space<vmem>>) attributes {dimension_semantics = [#tpu.dimension_semantics<parallel>], iteration_bounds = array<i64: 1>, scalar_prefetch = 0 : i64, scratch_operands = 0 : i64, tpu.core_type = #tpu.core_type<tc>, window_params = [{transform_indices = @transform_0, window_bounds = array<i64: 8, 128>}, {pipeline_mode = #tpu.pipeline_mode<synchronous>, transform_indices = @transform_1, window_bounds = array<i64: 3, 128, 128>}, {pipeline_mode = #tpu.pipeline_mode<synchronous>, transform_indices = @transform_2, window_bounds = array<i64: 3, 1, 128>}, {transform_indices = @transform_3, window_bounds = array<i64: 8, 128>}]} {
    %c0 = arith.constant 0 : index
    %c0_0 = arith.constant 0 : index
    %0 = vector.load %arg1[%c0, %c0_0] : memref<8x128xf32, #tpu.memory_space<vmem>>, vector<8x128xf32>
    %c0_1 = arith.constant 0 : index
    %c0_2 = arith.constant 0 : index
    %c0_3 = arith.constant 0 : index
    %1 = vector.load %arg2[%c0_1, %c0_2, %c0_3] : memref<3x128x128xf32, #tpu.memory_space<vmem>>, vector<1x128x128xf32>
    %2 = vector.shape_cast %1 : vector<1x128x128xf32> to vector<128x128xf32>
    %c1 = arith.constant 1 : index
    %c0_4 = arith.constant 0 : index
    %c0_5 = arith.constant 0 : index
    %3 = vector.load %arg2[%c1, %c0_4, %c0_5] : memref<3x128x128xf32, #tpu.memory_space<vmem>>, vector<1x128x128xf32>
    %4 = vector.shape_cast %3 : vector<1x128x128xf32> to vector<128x128xf32>
    %c2 = arith.constant 2 : index
    %c0_6 = arith.constant 0 : index
    %c0_7 = arith.constant 0 : index
    %5 = vector.load %arg2[%c2, %c0_6, %c0_7] : memref<3x128x128xf32, #tpu.memory_space<vmem>>, vector<1x128x128xf32>
    %6 = vector.shape_cast %5 : vector<1x128x128xf32> to vector<128x128xf32>
    %cst = arith.constant dense<0.000000e+00> : vector<8x128xf32>
    %7 = tpu.matmul %0, %2, %cst {dimension_numbers = #tpu.dot_dimension_numbers<[1], [0], [0], [1], [0, 0, 1, 1], [], []>} : vector<8x128xf32>, vector<128x128xf32>, vector<8x128xf32> -> vector<8x128xf32>
    %c0_8 = arith.constant 0 : index
    %c0_9 = arith.constant 0 : index
    %c0_10 = arith.constant 0 : index
    %8 = vector.load %arg3[%c0_8, %c0_9, %c0_10] : memref<3x1x128xf32, #tpu.memory_space<vmem>>, vector<1x1x128xf32>
    %9 = vector.shape_cast %8 : vector<1x1x128xf32> to vector<1x128xf32>
    %10 = vector.broadcast %9 : vector<1x128xf32> to vector<8x128xf32>
    %11 = arith.addf %7, %10 : vector<8x128xf32>
    %cst_11 = arith.constant 0.000000e+00 : f32
    %12 = vector.broadcast %cst_11 : f32 to vector<8x128xf32>
    %13 = arith.maximumf %11, %12 : vector<8x128xf32>
    %cst_12 = arith.constant dense<0.000000e+00> : vector<8x128xf32>
    %14 = tpu.matmul %13, %4, %cst_12 {dimension_numbers = #tpu.dot_dimension_numbers<[1], [0], [0], [1], [0, 0, 1, 1], [], []>} : vector<8x128xf32>, vector<128x128xf32>, vector<8x128xf32> -> vector<8x128xf32>
    %c1_13 = arith.constant 1 : index
    %c0_14 = arith.constant 0 : index
    %c0_15 = arith.constant 0 : index
    %15 = vector.load %arg3[%c1_13, %c0_14, %c0_15] : memref<3x1x128xf32, #tpu.memory_space<vmem>>, vector<1x1x128xf32>
    %16 = vector.shape_cast %15 : vector<1x1x128xf32> to vector<1x128xf32>
    %17 = vector.broadcast %16 : vector<1x128xf32> to vector<8x128xf32>
    %18 = arith.addf %14, %17 : vector<8x128xf32>
    %cst_16 = arith.constant 0.000000e+00 : f32
    %19 = vector.broadcast %cst_16 : f32 to vector<8x128xf32>
    %20 = arith.maximumf %18, %19 : vector<8x128xf32>
    %cst_17 = arith.constant dense<0.000000e+00> : vector<8x128xf32>
    %21 = tpu.matmul %20, %6, %cst_17 {dimension_numbers = #tpu.dot_dimension_numbers<[1], [0], [0], [1], [0, 0, 1, 1], [], []>} : vector<8x128xf32>, vector<128x128xf32>, vector<8x128xf32> -> vector<8x128xf32>
    %c2_18 = arith.constant 2 : index
    %c0_19 = arith.constant 0 : index
    %c0_20 = arith.constant 0 : index
    %22 = vector.load %arg3[%c2_18, %c0_19, %c0_20] : memref<3x1x128xf32, #tpu.memory_space<vmem>>, vector<1x1x128xf32>
    %23 = vector.shape_cast %22 : vector<1x1x128xf32> to vector<1x128xf32>
    %24 = vector.broadcast %23 : vector<1x128xf32> to vector<8x128xf32>
    %25 = arith.addf %21, %24 : vector<8x128xf32>
    %cst_21 = arith.constant 0.000000e+00 : f32
    %26 = vector.broadcast %cst_21 : f32 to vector<8x128xf32>
    %27 = arith.maximumf %25, %26 : vector<8x128xf32>
    %c0_22 = arith.constant 0 : index
    %c0_23 = arith.constant 0 : index
    %28 = vector.load %arg4[%c0_22, %c0_23] : memref<8x128xf32, #tpu.memory_space<vmem>>, vector<8x128xf32>
    tpu.vector_store %arg4[%c0_22, %c0_23], %27 {strides = array<i32>} : memref<8x128xf32, #tpu.memory_space<vmem>>, vector<8x128xf32>,
    return
  }
  func.func @transform_0(%arg0: i32) -> (i32, i32) {
    %c0_i32 = arith.constant 0 : i32
    %c0_i32_0 = arith.constant 0 : i32
    return %arg0, %c0_i32 : i32, i32
  }
  func.func @transform_1(%arg0: i32) -> (i32, i32, i32) {
    %c0_i32 = arith.constant 0 : i32
    %c0_i32_0 = arith.constant 0 : i32
    %c0_i32_1 = arith.constant 0 : i32
    %c0_i32_2 = arith.constant 0 : i32
    return %c0_i32, %c0_i32_0, %c0_i32_1 : i32, i32, i32
  }
  func.func @transform_2(%arg0: i32) -> (i32, i32, i32) {
    %c0_i32 = arith.constant 0 : i32
    %c0_i32_0 = arith.constant 0 : i32
    %c0_i32_1 = arith.constant 0 : i32
    %c0_i32_2 = arith.constant 0 : i32
    return %c0_i32, %c0_i32_0, %c0_i32_1 : i32, i32, i32
  }
  func.func @transform_3(%arg0: i32) -> (i32, i32) {
    %c0_i32 = arith.constant 0 : i32
    %c0_i32_0 = arith.constant 0 : i32
    return %arg0, %c0_i32 : i32, i32
  }
}

</mosaic_0001>

<llo_original>
// kernel: tpu_custom_call.1
$region0: #{tpu_custom_call.1}
  #allocation0 [shape = 'u32[]', space=smem, size = 0x4, offset = 0x4, fixed_abs, tag = 'smem constant byte address 0x4 - core index']
  #allocation1 [shape = 'u32[72,128]{1,0:T(1,128)}', space=vmem, size = 0x9000, scoped, tag = 'internal scratch']
  %s0 = inlined_call_operand.hbm [shape: f32[8,128], index: 0, kind: input, shape index: {}]
  %s1 = inlined_call_operand.hbm [shape: f32[3,128,128], index: 1, kind: input, shape index: {}]
  %s2 = inlined_call_operand.hbm [shape: f32[3,1,128], index: 2, kind: input, shape index: {}]
  %s3 = inlined_call_operand.hbm [shape: f32[8,128], index: 3, kind: output, shape index: {}]
  %s4 = sld [smem:[#allocation0]]
  $region34: #{tpu_custom_call.1} parent=0
    _
  %s6 = ssub.s32 1, %s4
  %s7 = scalar_select 0, %s6, %s4
  $region1: #{tpu_custom_call.1} parent=0
    #allocation2 [shape = 'u8[4096]{0}', space=vmem, size = 0x1000, scoped, tag = 'input window, operand 0, single buffered']
    #allocation3 [shape = 's32[1]{0}', space=sflag, size = 0x4, scoped, tag = 'scoped memory for tpu_custom_call.1']
    #allocation4 [shape = 's32[1]{0}', space=sflag, size = 0x4, scoped, tag = 'scoped memory for tpu_custom_call.1']
    #allocation5 [shape = 'u8[196608]{0}', space=vmem, size = 0x30000, scoped, tag = 'input window, operand 1, single buffered']
    #allocation6 [shape = 's32[1]{0}', space=sflag, size = 0x4, scoped, tag = 'scoped memory for tpu_custom_call.1']
    #allocation7 [shape = 'u8[1536]{0}', space=vmem, size = 0x800, scoped, tag = 'input window, operand 2, single buffered']
    #allocation8 [shape = 'u8[4096]{0}', space=vmem, size = 0x1000, scoped, tag = 'output window, operand 0, single buffered']
    %8 = vsyncpa [#allocation3], 0
    %9 = vsyncpa [#allocation6], 0
    %10 = vsyncpa [#allocation4], 0
    // Predicated region
    $region2: #{tpu_custom_call.1} parent=1 // pred_check
      _
    $region3: #{tpu_custom_call.1} parent=1 // pred_check_branch
      %12 = sbr.rel (0) target = $region5
    $region4: #{tpu_custom_call.1} parent=1 // pred_region
      %14 = vsyncadd [#allocation3], 0
      %s16 = sshll.u32 %s0, 4
      %s17 = int_to_ptr.hbm [resolvable:$true] %s16
      %s18 = sshll.u32 [#allocation2], 4
      %s19 = int_to_ptr.vmem [resolvable:$true] %s18
      %21 = dma.hbm_to_vmem [thread:$0]  %s17, 128, %s19, [#allocation3]
    $region5: #{tpu_custom_call.1} parent=1 // pred_fallthru
      _
    // Predicated region
    $region6: #{tpu_custom_call.1} parent=1 // pred_check
      _
    $region7: #{tpu_custom_call.1} parent=1 // pred_check_branch
      %23 = sbr.rel (0) target = $region9
    $region8: #{tpu_custom_call.1} parent=1 // pred_region
      %25 = vsyncadd [#allocation6], 0
      %s26 = sshll.u32 %s1, 4
      %s27 = int_to_ptr.hbm [resolvable:$true] %s26
      %s28 = sshll.u32 [#allocation5], 4
      %s29 = int_to_ptr.vmem [resolvable:$true] %s28
      %34 = dma.hbm_to_vmem [thread:$0]  %s27, 6144, %s29, [#allocation6], 128, 128, 8
    $region9: #{tpu_custom_call.1} parent=1 // pred_fallthru
      _
    // Predicated region
    $region10: #{tpu_custom_call.1} parent=1 // pred_check
      _
    $region11: #{tpu_custom_call.1} parent=1 // pred_check_branch
      %36 = sbr.rel (0) target = $region13
    $region12: #{tpu_custom_call.1} parent=1 // pred_region
      %38 = vsyncadd [#allocation6], 0
      %s39 = sshll.u32 %s2, 4
      %s40 = int_to_ptr.hbm [resolvable:$true] %s39
      %s41 = sshll.u32 [#allocation7], 4
      %s42 = int_to_ptr.vmem [resolvable:$true] %s41
      %47 = dma.hbm_to_vmem [thread:$0]  %s40, 48, %s42, [#allocation6], 16, 16, 1
    $region13: #{tpu_custom_call.1} parent=1 // pred_fallthru
      _
    // Predicated region
    $region14: #{tpu_custom_call.1} parent=1 // pred_check
      _
    $region15: #{tpu_custom_call.1} parent=1 // pred_check_branch
      %49 = sbr.rel (0) target = $region17
    $region16: #{tpu_custom_call.1} parent=1 // pred_region
      %51 = dma.done [#allocation3], 128
    $region17: #{tpu_custom_call.1} parent=1 // pred_fallthru
      _
    // Predicated region
    $region18: #{tpu_custom_call.1} parent=1 // pred_check
      _
    $region19: #{tpu_custom_call.1} parent=1 // pred_check_branch
      %53 = sbr.rel (0) target = $region21
    $region20: #{tpu_custom_call.1} parent=1 // pred_region
      %55 = dma.done [#allocation6], 6144
    $region21: #{tpu_custom_call.1} parent=1 // pred_fallthru
      _
    // Predicated region
    $region22: #{tpu_custom_call.1} parent=1 // pred_check
      _
    $region23: #{tpu_custom_call.1} parent=1 // pred_check_branch
      %57 = sbr.rel (0) target = $region25
    $region24: #{tpu_custom_call.1} parent=1 // pred_region
      %59 = dma.done [#allocation6], 48
    $region25: #{tpu_custom_call.1} parent=1 // pred_fallthru
      _
    %v60 = vld [vmem:[#allocation2] sm:$0xff]
    %v61 = vld [vmem:[#allocation5] sm:$0xff]
    %v62 = vld [vmem:[#allocation5 + $0x8] sm:$0xff]
    %v63 = vld [vmem:[#allocation5 + $0x10] sm:$0xff]
    %v64 = vld [vmem:[#allocation5 + $0x18] sm:$0xff]
    %v65 = vld [vmem:[#allocation5 + $0x20] sm:$0xff]
    %v66 = vld [vmem:[#allocation5 + $0x28] sm:$0xff]
    %v67 = vld [vmem:[#allocation5 + $0x30] sm:$0xff]
    %v68 = vld [vmem:[#allocation5 + $0x38] sm:$0xff]
    %v69 = vld [vmem:[#allocation5 + $0x40] sm:$0xff]
    %v70 = vld [vmem:[#allocation5 + $0x48] sm:$0xff]
    %v71 = vld [vmem:[#allocation5 + $0x50] sm:$0xff]
    %v72 = vld [vmem:[#allocation5 + $0x58] sm:$0xff]
    %v73 = vld [vmem:[#allocation5 + $0x60] sm:$0xff]
    %v74 = vld [vmem:[#allocation5 + $0x68] sm:$0xff]
    %v75 = vld [vmem:[#allocation5 + $0x70] sm:$0xff]
    %v76 = vld [vmem:[#allocation5 + $0x78] sm:$0xff]
    %s77 = scalar_lea.vmem [#allocation5], 128
    %v78 = vld [vmem:[%s77] sm:$0xff]
    %v79 = vld [vmem:[%s77 + $0x8] sm:$0xff]
    %v80 = vld [vmem:[%s77 + $0x10] sm:$0xff]
    %v81 = vld [vmem:[%s77 + $0x18] sm:$0xff]
    %v82 = vld [vmem:[%s77 + $0x20] sm:$0xff]
    %v83 = vld [vmem:[%s77 + $0x28] sm:$0xff]
    %v84 = vld [vmem:[%s77 + $0x30] sm:$0xff]
    %v85 = vld [vmem:[%s77 + $0x38] sm:$0xff]
    %v86 = vld [vmem:[%s77 + $0x40] sm:$0xff]
    %v87 = vld [vmem:[%s77 + $0x48] sm:$0xff]
    %v88 = vld [vmem:[%s77 + $0x50] sm:$0xff]
    %v89 = vld [vmem:[%s77 + $0x58] sm:$0xff]
    %v90 = vld [vmem:[%s77 + $0x60] sm:$0xff]
    %v91 = vld [vmem:[%s77 + $0x68] sm:$0xff]
    %v92 = vld [vmem:[%s77 + $0x70] sm:$0xff]
    %v93 = vld [vmem:[%s77 + $0x78] sm:$0xff]
    %s94 = scalar_lea.vmem [#allocation5], 256
    %v95 = vld [vmem:[%s94] sm:$0xff]
    %v96 = vld [vmem:[%s94 + $0x8] sm:$0xff]
    %v97 = vld [vmem:[%s94 + $0x10] sm:$0xff]
    %v98 = vld [vmem:[%s94 + $0x18] sm:$0xff]
    %v99 = vld [vmem:[%s94 + $0x20] sm:$0xff]
    %v100 = vld [vmem:[%s94 + $0x28] sm:$0xff]
    %v101 = vld [vmem:[%s94 + $0x30] sm:$0xff]
    %v102 = vld [vmem:[%s94 + $0x38] sm:$0xff]
    %v103 = vld [vmem:[%s94 + $0x40] sm:$0xff]
    %v104 = vld [vmem:[%s94 + $0x48] sm:$0xff]
    %v105 = vld [vmem:[%s94 + $0x50] sm:$0xff]
    %v106 = vld [vmem:[%s94 + $0x58] sm:$0xff]
    %v107 = vld [vmem:[%s94 + $0x60] sm:$0xff]
    %v108 = vld [vmem:[%s94 + $0x68] sm:$0xff]
    %v109 = vld [vmem:[%s94 + $0x70] sm:$0xff]
    %v110 = vld [vmem:[%s94 + $0x78] sm:$0xff]
    %v111 = vld [vmem:[#allocation7] sm:$0x1]
    %v113 = vperm.slane %v111, 0
    %115 = vmatpush.msra.mxu0 %v76
    %116 = vmatpush.msra.mxu0 %v75
    %117 = vmatpush.msra.mxu0 %v74
    %118 = vmatpush.msra.mxu0 %v73
    %119 = vmatpush.msra.mxu0 %v72
    %120 = vmatpush.msra.mxu0 %v71
    %121 = vmatpush.msra.mxu0 %v70
    %122 = vmatpush.msra.mxu0 %v69
    %123 = vmatpush.msra.mxu0 %v68
    %124 = vmatpush.msra.mxu0 %v67
    %125 = vmatpush.msra.mxu0 %v66
    %126 = vmatpush.msra.mxu0 %v65
    %127 = vmatpush.msra.mxu0 %v64
    %128 = vmatpush.msra.mxu0 %v63
    %129 = vmatpush.msra.mxu0 %v62
    %130 = vmatpush.msra.mxu0 %v61
    %131 = vmatmul.f32.gmra.mxu0 %v60
    %v132 = vpop.f32.mrf.mxu0
    %v133 = vadd.f32 %v113, %v132
    %134 = vdwg.mxu0
    %v135 = vmax.f32 %v133, 0.0
    %s136 = scalar_lea.vmem [#allocation7], 1
    %v137 = vld [vmem:[%s136] sm:$0x1]
    %v139 = vperm.slane %v137, 0
    %141 = vmatpush.msra.mxu0 %v93
    %142 = vmatpush.msra.mxu0 %v92
    %143 = vmatpush.msra.mxu0 %v91
    %144 = vmatpush.msra.mxu0 %v90
    %145 = vmatpush.msra.mxu0 %v89
    %146 = vmatpush.msra.mxu0 %v88
    %147 = vmatpush.msra.mxu0 %v87
    %148 = vmatpush.msra.mxu0 %v86
    %149 = vmatpush.msra.mxu0 %v85
    %150 = vmatpush.msra.mxu0 %v84
    %151 = vmatpush.msra.mxu0 %v83
    %152 = vmatpush.msra.mxu0 %v82
    %153 = vmatpush.msra.mxu0 %v81
    %154 = vmatpush.msra.mxu0 %v80
    %155 = vmatpush.msra.mxu0 %v79
    %156 = vmatpush.msra.mxu0 %v78
    %157 = vmatmul.f32.gmra.mxu0 %v135
    %v158 = vpop.f32.mrf.mxu0
    %v159 = vadd.f32 %v139, %v158
    %160 = vdwg.mxu0
    %v161 = vmax.f32 %v159, 0.0
    %s162 = scalar_lea.vmem [#allocation7], 2
    %v163 = vld [vmem:[%s162] sm:$0x1]
    %v165 = vperm.slane %v163, 0
    %167 = vmatpush.msra.mxu0 %v110
    %168 = vmatpush.msra.mxu0 %v109
    %169 = vmatpush.msra.mxu0 %v108
    %170 = vmatpush.msra.mxu0 %v107
    %171 = vmatpush.msra.mxu0 %v106
    %172 = vmatpush.msra.mxu0 %v105
    %173 = vmatpush.msra.mxu0 %v104
    %174 = vmatpush.msra.mxu0 %v103
    %175 = vmatpush.msra.mxu0 %v102
    %176 = vmatpush.msra.mxu0 %v101
    %177 = vmatpush.msra.mxu0 %v100
    %178 = vmatpush.msra.mxu0 %v99
    %179 = vmatpush.msra.mxu0 %v98
    %180 = vmatpush.msra.mxu0 %v97
    %181 = vmatpush.msra.mxu0 %v96
    %182 = vmatpush.msra.mxu0 %v95
    %183 = vmatmul.f32.gmra.mxu0 %v161
    %v184 = vpop.f32.mrf.mxu0
    %v185 = vadd.f32 %v165, %v184
    %186 = vdwg.mxu0
    %v187 = vmax.f32 %v185, 0.0
    %188 = vst [vmem:[#allocation8] sm:$0xff] %v187
    // Predicated region
    $region26: #{tpu_custom_call.1} parent=1 // pred_check
      _
    $region27: #{tpu_custom_call.1} parent=1 // pred_check_branch
      %190 = sbr.rel (0) target = $region29
    $region28: #{tpu_custom_call.1} parent=1 // pred_region
      %192 = vsyncadd [#allocation4], 0
      %s194 = sshll.u32 [#allocation8], 4
      %s195 = int_to_ptr.vmem [resolvable:$true] %s194
      %s196 = sshll.u32 %s3, 4
      %s197 = int_to_ptr.hbm [resolvable:$true] %s196
      %199 = dma.vmem_to_hbm [thread:$0]  %s195, 128, %s197, [#allocation4]
    $region29: #{tpu_custom_call.1} parent=1 // pred_fallthru
      _
    // Predicated region
    $region30: #{tpu_custom_call.1} parent=1 // pred_check
      _
    $region31: #{tpu_custom_call.1} parent=1 // pred_check_branch
      %201 = sbr.rel (0) target = $region33
    $region32: #{tpu_custom_call.1} parent=1 // pred_region
      %203 = dma.done [#allocation4], 128
    $region33: #{tpu_custom_call.1} parent=1 // pred_fallthru
      _
    %204 = vsyncpa [#allocation3], 1
    %205 = vsyncpa [#allocation6], 1
    %206 = vsyncpa [#allocation4], 1

</llo_original>
